<compile_context>
chip_gen: v7x
topology: tpu7x:2x2x1
jax: 0.10.0
libtpu: 0.0.40
codegen_flags: <defaults>
</compile_context>

<pallas_src>
import functools
import math

import jax
import jax.numpy as jnp
import numpy as np
from jax.experimental import pallas as pl
from jax.experimental.pallas import tpu as pltpu


def gat_kernel(x_ref, w_ref, a12_ref, s_ref, blend_ref, out_ref, *, alpha):
    bt, n, fin = x_ref.shape
    fout = w_ref.shape[1]

    # ---- Batch-fused projection: one MXU matmul for the whole batch tile. ----
    # (Leading-dim merge/split is layout-free.)
    x2 = x_ref[...].reshape(bt * n, fin)
    h2 = jnp.dot(x2, w_ref[...], preferred_element_type=jnp.float32)      # (bt*n, fout)
    # u/v on the MXU instead of VPU-mul + XLU reduce: h @ [a1 | a2].
    uv2 = jnp.dot(h2, a12_ref[...], preferred_element_type=jnp.float32)   # (bt*n, 2)
    h = h2.reshape(bt, n, fout)
    uv = uv2.reshape(bt, n, 2)

    # ---- Row-indexed terms u[2i], u[2i+1], v[2i], v[2i+1] via one tiny batched
    #      MXU matmul against the static (2n, n) selection matrix (sublane->
    #      sublane move, so the MXU is the right unit). ----
    sb = jnp.broadcast_to(s_ref[...], (bt, 2 * n, n))
    sel = jnp.einsum('bkn,bnc->bkc', sb, uv,
                     preferred_element_type=jnp.float32)                  # (bt, 2n, 2)
    pu0 = sel[:, 0:n, 0:1]          # u[clamp(2i)]   -> broadcasts over columns j
    pu1 = sel[:, n:2 * n, 0:1]      # u[clamp(2i+1)]
    pv0 = sel[:, 0:n, 1:2]          # v[clamp(2i)]
    pv1 = sel[:, n:2 * n, 1:2]      # v[clamp(2i+1)]

    # ---- Static 0/1 blend masks + column one-hots (host-precomputed; the
    #      constant block is DMA'd once and not re-fetched across grid steps).
    bm = blend_ref[...]                                    # (8, n, n)
    wu0, wu1, wub = bm[0], bm[1], bm[2]
    wv0, wv1, wvb = bm[3], bm[4], bm[5]
    t0, t1 = bm[6], bm[7]

    # ---- Column-indexed terms u[(2j)%n], v[(2j+1)%n] via one-hot sublane
    #      reduce (keepdims keeps the natural (bt,1,n) layout, no transpose).
    u_col = uv[:, :, 0:1]                                  # (bt, n, 1)
    v_col = uv[:, :, 1:2]
    qu = jnp.sum(u_col * t0, axis=-2, keepdims=True)       # (bt, 1, n) = u[(2j)%n]
    qv = jnp.sum(v_col * t1, axis=-2, keepdims=True)       # (bt, 1, n) = v[(2j+1)%n]

    # ---- Stitch e: the masks are mutually exclusive within each group, so this
    #      is an exact selection expressed as pure broadcast FMAs (no iota, no
    #      compares, no select chains in the per-step body).
    e = (wu0 * pu0 + wu1 * pu1 + wub * qu
         + wv0 * pv0 + wv1 * pv1 + wvb * qv)               # (bt, n, n)

    # LeakyReLU(alpha)
    e = jnp.where(e >= 0, e, alpha * e)

    # Softmax over dim=-1 of the UNMASKED e (faithful: the adj-masked tensor in
    # the PyTorch forward is discarded).  Normalization via the EUP reciprocal.
    m = jnp.max(e, axis=-1, keepdims=True)
    pexp = jnp.exp(e - m)
    denom = jnp.sum(pexp, axis=-1, keepdims=True)
    attn = pexp * pl.reciprocal(denom, approx=True)

    # TODO(synk): F.dropout with training=True is PyTorch-RNG dependent; this is
    # eval-mode identity.  (In-kernel pltpu.prng_* could provide TPU dropout.)

    hp = jnp.einsum('bij,bjf->bif', attn, h,
                    preferred_element_type=jnp.float32)    # (bt, n, fout)

    # ELU (concat=True).  Clamp the negative branch so the unselected exp of a
    # large positive value never produces inf under where's dual evaluation.
    out_ref[...] = jnp.where(hp > 0, hp, jnp.exp(jnp.minimum(hp, 0.0)) - 1.0)
    # TODO(synk): output last dim Fout=32 (<128 lanes) still produces masked
    # stores; a lane-dense (bt, N*Fout) slab would need a minor-dim relayout
    # inside the kernel (risky reshape of the last two dims), skipped in favour
    # of guaranteed lowering -- output bytes here are tiny anyway.


def _row_selection_matrix(N):
    """Static (2N, N) 0/1 matrix: row i selects node clamp(2i), row N+i selects
    clamp(2i+1).  Clamped rows are multiplied by 0 by the blend masks."""
    idx0 = np.minimum(2 * np.arange(N), N - 1)
    idx1 = np.minimum(2 * np.arange(N) + 1, N - 1)
    s = np.zeros((2 * N, N), np.float32)
    s[np.arange(N), idx0] = 1.0
    s[N + np.arange(N), idx1] = 1.0
    return s


def _blend_masks(N):
    """Static (8, N, N) f32: [wu0, wu1, wuB, wv0, wv1, wvB, t0, t1].

    wu*/wv* are the mutually-exclusive region masks implied by the reference
    repeat/cat(dim=1)/view index arithmetic; t0/t1 are the column one-hots
    t0[k,j] = [k == (2j)%N], t1[k,j] = [k == (2j+1)%N]."""
    i = np.arange(N)[:, None]
    j = np.arange(N)[None, :]
    r1 = 2 * N * i + 2 * j
    in_a1 = r1 < N * N
    in_a2 = (r1 + 1) < N * N
    left1 = np.broadcast_to((2 * j) < N, (N, N))
    left2 = np.broadcast_to((2 * j + 1) < N, (N, N))
    k = np.arange(N)[:, None]
    t0 = (k == ((2 * j) % N))
    t1 = (k == ((2 * j + 1) % N))
    blend = np.stack([
        in_a1 & left1, in_a1 & ~left1, ~in_a1,
        in_a2 & left2, in_a2 & ~left2, ~in_a2,
        t0, t1,
    ]).astype(np.float32)
    return blend


def _pick_batch_tile(B, N, Fin, Fout, vmem_budget_bytes=8 * 1024 * 1024):
    """Largest divisor of B whose per-step f32 footprint fits a modest VMEM
    budget and whose fused row count (bt*N) stays reasonable for the MXU."""
    per_sample = 4 * (2 * N * Fin + 3 * N * Fout + 10 * N * N + 8 * N)
    cap_vmem = max(1, vmem_budget_bytes // max(per_sample, 1))
    cap_rows = max(1, 1024 // max(N, 1))
    bt = max(1, min(B, cap_vmem, cap_rows))
    while B % bt != 0:
        bt -= 1
    return bt


def gat_forward(input_feature, adj, W, a, alpha):
    B, N, Fin = input_feature.shape
    Fout = W.shape[1]
    assert adj.shape == (N, N)
    # NOTE: adj is intentionally unused -- faithful to the reference forward,
    # where the masked tensor is overwritten before use.

    a12 = jnp.concatenate([a[:Fout, :], a[Fout:, :]], axis=1)   # (Fout, 2)
    s_mat = jnp.asarray(_row_selection_matrix(N))               # (2N, N)
    blend = jnp.asarray(_blend_masks(N))                        # (8, N, N)

    bt = _pick_batch_tile(B, N, Fin, Fout)
    grid = (B // bt,)

    flops = (2 * B * N * Fin * Fout          # x @ W
             + 4 * B * N * Fout              # h @ [a1|a2]
             + 8 * B * N * N                 # selection matmul
             + 12 * B * N * N                # blend stitch + one-hot reduces
             + 2 * B * N * N * Fout)         # attn @ h
    transcendentals = B * N * N + B * N * Fout + B * N
    bytes_accessed = 4 * (B * N * Fin + Fin * Fout + 2 * Fout
                          + 2 * N * N + 8 * N * N + B * N * Fout)

    kernel = functools.partial(gat_kernel, alpha=float(alpha))

    return pl.pallas_call(
        kernel,
        out_shape=jax.ShapeDtypeStruct((B, N, Fout), jnp.float32),
        grid_spec=pltpu.PrefetchScalarGridSpec(
            num_scalar_prefetch=0,
            grid=grid,
            in_specs=[
                pl.BlockSpec((bt, N, Fin), lambda b: (b, 0, 0)),
                pl.BlockSpec((Fin, Fout), lambda b: (0, 0)),
                pl.BlockSpec((Fout, 2), lambda b: (0, 0)),
                pl.BlockSpec((2 * N, N), lambda b: (0, 0)),
                pl.BlockSpec((8, N, N), lambda b: (0, 0, 0)),
            ],
            out_specs=pl.BlockSpec((bt, N, Fout), lambda b: (b, 0, 0)),
        ),
        compiler_params=pltpu.CompilerParams(
            dimension_semantics=("parallel",)),
        cost_estimate=pl.CostEstimate(
            flops=flops,
            transcendentals=transcendentals,
            bytes_accessed=bytes_accessed),
    )(input_feature, W, a12, s_mat, blend)


def gat_reference(x, adj, W, a, alpha):
    """Pure-JAX transliteration of the PyTorch forward (eval mode)."""
    B, N, Fin = x.shape
    Fout = W.shape[1]
    h = x @ W                                                   # (B, N, Fout)
    rep1 = jnp.tile(h, (1, 1, N)).reshape(B, N * N, Fout)
    rep2 = jnp.tile(h, (1, N, 1))
    a_input = jnp.concatenate([rep1, rep2], axis=1).reshape(B, N, N, 2 * Fout)
    e = (a_input @ a)[..., 0]
    e = jnp.where(e >= 0, e, alpha * e)
    attn = jax.nn.softmax(e, axis=2)
    hp = attn @ h
    return jnp.where(hp > 0, hp, jnp.exp(jnp.minimum(hp, 0.0)) - 1.0)


def xavier_uniform(key, shape, gain):
    fan_in, fan_out = shape[0], shape[1]
    bound = gain * math.sqrt(6.0 / (fan_in + fan_out))
    return jax.random.uniform(key, shape, jnp.float32, -bound, bound)


if __name__ == "__main__":
    B, N, Fin, Fout = 2, 8, 16, 32
    alpha = 0.2
    dropout = 0.5  # unused (eval mode)

    key = jax.random.PRNGKey(0)
    kx, kadj, kw, ka = jax.random.split(key, 4)
    x = jax.random.normal(kx, (B, N, Fin), jnp.float32)
    adj = (jax.random.uniform(kadj, (N, N)) > 0.5).astype(jnp.float32)
    W = xavier_uniform(kw, (Fin, Fout), 1.414)
    a = xavier_uniform(ka, (2 * Fout, 1), 1.414)

    out = gat_forward(x, adj, W, a, alpha)
    out = jax.block_until_ready(out)

    ref = gat_reference(x, adj, W, a, alpha)
    # 2e-3 tolerance accommodates the EUP approximate-reciprocal softmax
    # normalization (a single per-row scale factor); everything else is f32.
    np.testing.assert_allclose(np.asarray(out), np.asarray(ref),
                               rtol=2e-3, atol=2e-3)

    print("KERNEL_OK")
</pallas_src>

<mosaic_0001>
module attributes {stable_mosaic.version = 11 : i64} {
  func.func @gat_kernel(%arg0: i32, %arg1: memref<2x8x16xf32, #tpu.memory_space<vmem>>, %arg2: memref<16x32xf32, #tpu.memory_space<vmem>>, %arg3: memref<32x2xf32, #tpu.memory_space<vmem>>, %arg4: memref<16x8xf32, #tpu.memory_space<vmem>>, %arg5: memref<8x8x8xf32, #tpu.memory_space<vmem>>, %arg6: memref<2x8x32xf32, #tpu.memory_space<vmem>>) attributes {dimension_semantics = [#tpu.dimension_semantics<parallel>], iteration_bounds = array<i64: 1>, scalar_prefetch = 0 : i64, scratch_operands = 0 : i64, tpu.core_type = #tpu.core_type<tc>, window_params = [{transform_indices = @transform_0, window_bounds = array<i64: 2, 8, 16>}, {pipeline_mode = #tpu.pipeline_mode<synchronous>, transform_indices = @transform_1, window_bounds = array<i64: 16, 32>}, {pipeline_mode = #tpu.pipeline_mode<synchronous>, transform_indices = @transform_2, window_bounds = array<i64: 32, 2>}, {pipeline_mode = #tpu.pipeline_mode<synchronous>, transform_indices = @transform_3, window_bounds = array<i64: 16, 8>}, {pipeline_mode = #tpu.pipeline_mode<synchronous>, transform_indices = @transform_4, window_bounds = array<i64: 8, 8, 8>}, {transform_indices = @transform_5, window_bounds = array<i64: 2, 8, 32>}]} {
    %c0 = arith.constant 0 : index
    %c0_0 = arith.constant 0 : index
    %c0_1 = arith.constant 0 : index
    %0 = vector.load %arg1[%c0, %c0_0, %c0_1] : memref<2x8x16xf32, #tpu.memory_space<vmem>>, vector<2x8x16xf32>
    %1 = vector.shape_cast %0 : vector<2x8x16xf32> to vector<16x16xf32>
    %c0_2 = arith.constant 0 : index
    %c0_3 = arith.constant 0 : index
    %2 = vector.load %arg2[%c0_2, %c0_3] : memref<16x32xf32, #tpu.memory_space<vmem>>, vector<16x32xf32>
    %cst = arith.constant dense<0.000000e+00> : vector<16x32xf32>
    %3 = tpu.matmul %1, %2, %cst {dimension_numbers = #tpu.dot_dimension_numbers<[1], [0], [0], [1], [0, 0, 1, 1], [], []>} : vector<16x16xf32>, vector<16x32xf32>, vector<16x32xf32> -> vector<16x32xf32>
    %c0_4 = arith.constant 0 : index
    %c0_5 = arith.constant 0 : index
    %4 = vector.load %arg3[%c0_4, %c0_5] : memref<32x2xf32, #tpu.memory_space<vmem>>, vector<32x2xf32>
    %cst_6 = arith.constant dense<0.000000e+00> : vector<16x2xf32>
    %5 = tpu.matmul %3, %4, %cst_6 {dimension_numbers = #tpu.dot_dimension_numbers<[1], [0], [0], [1], [0, 0, 1, 1], [], []>} : vector<16x32xf32>, vector<32x2xf32>, vector<16x2xf32> -> vector<16x2xf32>
    %6 = vector.shape_cast %3 : vector<16x32xf32> to vector<2x8x32xf32>
    %7 = vector.shape_cast %5 : vector<16x2xf32> to vector<2x8x2xf32>
    %c0_7 = arith.constant 0 : index
    %c0_8 = arith.constant 0 : index
    %8 = vector.load %arg4[%c0_7, %c0_8] : memref<16x8xf32, #tpu.memory_space<vmem>>, vector<16x8xf32>
    %9 = vector.shape_cast %8 : vector<16x8xf32> to vector<1x16x8xf32>
    %10 = vector.broadcast %9 : vector<1x16x8xf32> to vector<2x16x8xf32>
    "tpu.trace_start"() <{level = 10 : i32, message = "bkn,bnc->bkc"}> : () -> ()
    %cst_9 = arith.constant dense<0.000000e+00> : vector<2x16x2xf32>
    %11 = tpu.matmul %10, %7, %cst_9 {dimension_numbers = #tpu.dot_dimension_numbers<[2], [1], [1], [2], [0, 0, 0, 1, 1, 2], [0], [0]>} : vector<2x16x8xf32>, vector<2x8x2xf32>, vector<2x16x2xf32> -> vector<2x16x2xf32>
    "tpu.trace_stop"() : () -> ()
    %12 = vector.extract_strided_slice %11 {offsets = [0, 0, 0], sizes = [2, 8, 1], strides = [1, 1, 1]} : vector<2x16x2xf32> to vector<2x8x1xf32>
    %13 = vector.extract_strided_slice %11 {offsets = [0, 8, 0], sizes = [2, 8, 1], strides = [1, 1, 1]} : vector<2x16x2xf32> to vector<2x8x1xf32>
    %14 = vector.extract_strided_slice %11 {offsets = [0, 0, 1], sizes = [2, 8, 1], strides = [1, 1, 1]} : vector<2x16x2xf32> to vector<2x8x1xf32>
    %15 = vector.extract_strided_slice %11 {offsets = [0, 8, 1], sizes = [2, 8, 1], strides = [1, 1, 1]} : vector<2x16x2xf32> to vector<2x8x1xf32>
    %c0_10 = arith.constant 0 : index
    %c0_11 = arith.constant 0 : index
    %c0_12 = arith.constant 0 : index
    %16 = vector.load %arg5[%c0_10, %c0_11, %c0_12] : memref<8x8x8xf32, #tpu.memory_space<vmem>>, vector<8x8x8xf32>
    %17 = vector.extract_strided_slice %16 {offsets = [0, 0, 0], sizes = [1, 8, 8], strides = [1, 1, 1]} : vector<8x8x8xf32> to vector<1x8x8xf32>
    %18 = vector.shape_cast %17 : vector<1x8x8xf32> to vector<8x8xf32>
    %19 = vector.extract_strided_slice %16 {offsets = [1, 0, 0], sizes = [1, 8, 8], strides = [1, 1, 1]} : vector<8x8x8xf32> to vector<1x8x8xf32>
    %20 = vector.shape_cast %19 : vector<1x8x8xf32> to vector<8x8xf32>
    %21 = vector.extract_strided_slice %16 {offsets = [2, 0, 0], sizes = [1, 8, 8], strides = [1, 1, 1]} : vector<8x8x8xf32> to vector<1x8x8xf32>
    %22 = vector.shape_cast %21 : vector<1x8x8xf32> to vector<8x8xf32>
    %23 = vector.extract_strided_slice %16 {offsets = [3, 0, 0], sizes = [1, 8, 8], strides = [1, 1, 1]} : vector<8x8x8xf32> to vector<1x8x8xf32>
    %24 = vector.shape_cast %23 : vector<1x8x8xf32> to vector<8x8xf32>
    %25 = vector.extract_strided_slice %16 {offsets = [4, 0, 0], sizes = [1, 8, 8], strides = [1, 1, 1]} : vector<8x8x8xf32> to vector<1x8x8xf32>
    %26 = vector.shape_cast %25 : vector<1x8x8xf32> to vector<8x8xf32>
    %27 = vector.extract_strided_slice %16 {offsets = [5, 0, 0], sizes = [1, 8, 8], strides = [1, 1, 1]} : vector<8x8x8xf32> to vector<1x8x8xf32>
    %28 = vector.shape_cast %27 : vector<1x8x8xf32> to vector<8x8xf32>
    %29 = vector.extract_strided_slice %16 {offsets = [6, 0, 0], sizes = [1, 8, 8], strides = [1, 1, 1]} : vector<8x8x8xf32> to vector<1x8x8xf32>
    %30 = vector.shape_cast %29 : vector<1x8x8xf32> to vector<8x8xf32>
    %31 = vector.extract_strided_slice %16 {offsets = [7, 0, 0], sizes = [1, 8, 8], strides = [1, 1, 1]} : vector<8x8x8xf32> to vector<1x8x8xf32>
    %32 = vector.shape_cast %31 : vector<1x8x8xf32> to vector<8x8xf32>
    %33 = vector.extract_strided_slice %7 {offsets = [0, 0, 0], sizes = [2, 8, 1], strides = [1, 1, 1]} : vector<2x8x2xf32> to vector<2x8x1xf32>
    %34 = vector.extract_strided_slice %7 {offsets = [0, 0, 1], sizes = [2, 8, 1], strides = [1, 1, 1]} : vector<2x8x2xf32> to vector<2x8x1xf32>
    %35 = vector.shape_cast %30 : vector<8x8xf32> to vector<1x8x8xf32>
    %36 = vector.broadcast %33 : vector<2x8x1xf32> to vector<2x8x8xf32>
    %37 = vector.broadcast %35 : vector<1x8x8xf32> to vector<2x8x8xf32>
    %38 = arith.mulf %36, %37 : vector<2x8x8xf32>
    %cst_13 = arith.constant dense<0.000000e+00> : vector<2x8xf32>
    %39 = vector.multi_reduction <add>, %38, %cst_13 [1] : vector<2x8x8xf32> to vector<2x8xf32>
    %40 = vector.shape_cast %39 : vector<2x8xf32> to vector<2x1x8xf32>
    %41 = vector.shape_cast %32 : vector<8x8xf32> to vector<1x8x8xf32>
    %42 = vector.broadcast %34 : vector<2x8x1xf32> to vector<2x8x8xf32>
    %43 = vector.broadcast %41 : vector<1x8x8xf32> to vector<2x8x8xf32>
    %44 = arith.mulf %42, %43 : vector<2x8x8xf32>
    %cst_14 = arith.constant dense<0.000000e+00> : vector<2x8xf32>
    %45 = vector.multi_reduction <add>, %44, %cst_14 [1] : vector<2x8x8xf32> to vector<2x8xf32>
    %46 = vector.shape_cast %45 : vector<2x8xf32> to vector<2x1x8xf32>
    %47 = vector.shape_cast %18 : vector<8x8xf32> to vector<1x8x8xf32>
    %48 = vector.broadcast %47 : vector<1x8x8xf32> to vector<2x8x8xf32>
    %49 = vector.broadcast %12 : vector<2x8x1xf32> to vector<2x8x8xf32>
    %50 = arith.mulf %48, %49 : vector<2x8x8xf32>
    %51 = vector.shape_cast %20 : vector<8x8xf32> to vector<1x8x8xf32>
    %52 = vector.broadcast %51 : vector<1x8x8xf32> to vector<2x8x8xf32>
    %53 = vector.broadcast %13 : vector<2x8x1xf32> to vector<2x8x8xf32>
    %54 = arith.mulf %52, %53 : vector<2x8x8xf32>
    %55 = arith.addf %50, %54 : vector<2x8x8xf32>
    %56 = vector.shape_cast %22 : vector<8x8xf32> to vector<1x8x8xf32>
    %57 = vector.broadcast %56 : vector<1x8x8xf32> to vector<2x8x8xf32>
    %58 = vector.broadcast %40 : vector<2x1x8xf32> to vector<2x8x8xf32>
    %59 = arith.mulf %57, %58 : vector<2x8x8xf32>
    %60 = arith.addf %55, %59 : vector<2x8x8xf32>
    %61 = vector.shape_cast %24 : vector<8x8xf32> to vector<1x8x8xf32>
    %62 = vector.broadcast %61 : vector<1x8x8xf32> to vector<2x8x8xf32>
    %63 = vector.broadcast %14 : vector<2x8x1xf32> to vector<2x8x8xf32>
    %64 = arith.mulf %62, %63 : vector<2x8x8xf32>
    %65 = arith.addf %60, %64 : vector<2x8x8xf32>
    %66 = vector.shape_cast %26 : vector<8x8xf32> to vector<1x8x8xf32>
    %67 = vector.broadcast %66 : vector<1x8x8xf32> to vector<2x8x8xf32>
    %68 = vector.broadcast %15 : vector<2x8x1xf32> to vector<2x8x8xf32>
    %69 = arith.mulf %67, %68 : vector<2x8x8xf32>
    %70 = arith.addf %65, %69 : vector<2x8x8xf32>
    %71 = vector.shape_cast %28 : vector<8x8xf32> to vector<1x8x8xf32>
    %72 = vector.broadcast %71 : vector<1x8x8xf32> to vector<2x8x8xf32>
    %73 = vector.broadcast %46 : vector<2x1x8xf32> to vector<2x8x8xf32>
    %74 = arith.mulf %72, %73 : vector<2x8x8xf32>
    %75 = arith.addf %70, %74 : vector<2x8x8xf32>
    %cst_15 = arith.constant 0.000000e+00 : f32
    %76 = vector.broadcast %cst_15 : f32 to vector<2x8x8xf32>
    %77 = arith.cmpf oge, %75, %76 : vector<2x8x8xf32>
    %cst_16 = arith.constant 2.000000e-01 : f32
    %78 = vector.broadcast %cst_16 : f32 to vector<2x8x8xf32>
    %79 = arith.mulf %78, %75 : vector<2x8x8xf32>
    %80 = arith.select %77, %75, %79 : vector<2x8x8xi1>, vector<2x8x8xf32>
    %cst_17 = arith.constant dense<0xFF800000> : vector<2x8xf32>
    %81 = vector.multi_reduction <maximumf>, %80, %cst_17 [2] : vector<2x8x8xf32> to vector<2x8xf32>
    %82 = vector.shape_cast %81 : vector<2x8xf32> to vector<2x8x1xf32>
    %83 = vector.broadcast %82 : vector<2x8x1xf32> to vector<2x8x8xf32>
    %84 = arith.subf %80, %83 : vector<2x8x8xf32>
    %85 = math.exp %84 : vector<2x8x8xf32>
    %cst_18 = arith.constant dense<0.000000e+00> : vector<2x8xf32>
    %86 = vector.multi_reduction <add>, %85, %cst_18 [2] : vector<2x8x8xf32> to vector<2x8xf32>
    %87 = vector.shape_cast %86 : vector<2x8xf32> to vector<2x8x1xf32>
    %88 = tpu.reciprocal %87 {approx = true} : vector<2x8x1xf32> -> vector<2x8x1xf32>
    %89 = vector.broadcast %88 : vector<2x8x1xf32> to vector<2x8x8xf32>
    %90 = arith.mulf %85, %89 : vector<2x8x8xf32>
    "tpu.trace_start"() <{level = 10 : i32, message = "bij,bjf->bif"}> : () -> ()
    %cst_19 = arith.constant dense<0.000000e+00> : vector<2x8x32xf32>
    %91 = tpu.matmul %90, %6, %cst_19 {dimension_numbers = #tpu.dot_dimension_numbers<[2], [1], [1], [2], [0, 0, 0, 1, 1, 2], [0], [0]>} : vector<2x8x8xf32>, vector<2x8x32xf32>, vector<2x8x32xf32> -> vector<2x8x32xf32>
    %cst_20 = arith.constant 0.000000e+00 : f32
    "tpu.trace_stop"() : () -> ()
    %92 = vector.broadcast %cst_20 : f32 to vector<2x8x32xf32>
    %93 = arith.cmpf ogt, %91, %92 : vector<2x8x32xf32>
    %cst_21 = arith.constant 0.000000e+00 : f32
    %94 = vector.broadcast %cst_21 : f32 to vector<2x8x32xf32>
    %95 = arith.minimumf %91, %94 : vector<2x8x32xf32>
    %96 = math.exp %95 : vector<2x8x32xf32>
    %cst_22 = arith.constant 1.000000e+00 : f32
    %97 = vector.broadcast %cst_22 : f32 to vector<2x8x32xf32>
    %98 = arith.subf %96, %97 : vector<2x8x32xf32>
    %99 = arith.select %93, %91, %98 : vector<2x8x32xi1>, vector<2x8x32xf32>
    %c0_23 = arith.constant 0 : index
    %c0_24 = arith.constant 0 : index
    %c0_25 = arith.constant 0 : index
    %100 = vector.load %arg6[%c0_23, %c0_24, %c0_25] : memref<2x8x32xf32, #tpu.memory_space<vmem>>, vector<2x8x32xf32>
    tpu.vector_store %arg6[%c0_23, %c0_24, %c0_25], %99 {strides = array<i32>} : memref<2x8x32xf32, #tpu.memory_space<vmem>>, vector<2x8x32xf32>,
    return
  }
  func.func @transform_0(%arg0: i32) -> (i32, i32, i32) {
    %c0_i32 = arith.constant 0 : i32
    %c0_i32_0 = arith.constant 0 : i32
    %c0_i32_1 = arith.constant 0 : i32
    return %arg0, %c0_i32, %c0_i32_0 : i32, i32, i32
  }
  func.func @transform_1(%arg0: i32) -> (i32, i32) {
    %c0_i32 = arith.constant 0 : i32
    %c0_i32_0 = arith.constant 0 : i32
    %c0_i32_1 = arith.constant 0 : i32
    return %c0_i32, %c0_i32_0 : i32, i32
  }
  func.func @transform_2(%arg0: i32) -> (i32, i32) {
    %c0_i32 = arith.constant 0 : i32
    %c0_i32_0 = arith.constant 0 : i32
    %c0_i32_1 = arith.constant 0 : i32
    return %c0_i32, %c0_i32_0 : i32, i32
  }
  func.func @transform_3(%arg0: i32) -> (i32, i32) {
    %c0_i32 = arith.constant 0 : i32
    %c0_i32_0 = arith.constant 0 : i32
    %c0_i32_1 = arith.constant 0 : i32
    return %c0_i32, %c0_i32_0 : i32, i32
  }
  func.func @transform_4(%arg0: i32) -> (i32, i32, i32) {
    %c0_i32 = arith.constant 0 : i32
    %c0_i32_0 = arith.constant 0 : i32
    %c0_i32_1 = arith.constant 0 : i32
    %c0_i32_2 = arith.constant 0 : i32
    return %c0_i32, %c0_i32_0, %c0_i32_1 : i32, i32, i32
  }
  func.func @transform_5(%arg0: i32) -> (i32, i32, i32) {
    %c0_i32 = arith.constant 0 : i32
    %c0_i32_0 = arith.constant 0 : i32
    %c0_i32_1 = arith.constant 0 : i32
    return %arg0, %c0_i32, %c0_i32_0 : i32, i32, i32
  }
}

</mosaic_0001>

<llo_original>
// kernel: tpu_custom_call.1
$region0: #{tpu_custom_call.1}
  #allocation0 [shape = 'u32[]', space=smem, size = 0x4, offset = 0x4, fixed_abs, tag = 'smem constant byte address 0x4 - core index']
  #allocation1 [shape = 'u32[144,128]{1,0:T(1,128)}', space=vmem, size = 0x12000, scoped, tag = 'internal scratch']
  %s0 = inlined_call_operand.hbm [shape: f32[2,8,16], index: 0, kind: input, shape index: {}]
  %s1 = inlined_call_operand.hbm [shape: f32[16,32], index: 1, kind: input, shape index: {}]
  %s2 = inlined_call_operand.vmem [shape: f32[32,2], index: 2, kind: input, shape index: {}]
  %s3 = inlined_call_operand.vmem [shape: f32[16,8], index: 3, kind: input, shape index: {}]
  %s4 = inlined_call_operand.vmem [shape: f32[8,8,8], index: 4, kind: input, shape index: {}]
  %s5 = inlined_call_operand.hbm [shape: f32[2,8,32], index: 5, kind: output, shape index: {}]
  %s6 = sld [smem:[#allocation0]]
  $region38: #{tpu_custom_call.1} parent=0
    _
  %s8 = ssub.s32 1, %s6
  %s9 = scalar_select 0, %s8, %s6
  $region1: #{tpu_custom_call.1} parent=0
    #allocation2 [shape = 'u8[8192]{0}', space=vmem, size = 0x2000, scoped, tag = 'input window, operand 0, single buffered']
    #allocation3 [shape = 's32[1]{0}', space=sflag, size = 0x4, scoped, tag = 'scoped memory for tpu_custom_call.1']
    #allocation4 [shape = 's32[1]{0}', space=sflag, size = 0x4, scoped, tag = 'scoped memory for tpu_custom_call.1']
    #allocation5 [shape = 'u8[8192]{0}', space=vmem, size = 0x2000, scoped, tag = 'input window, operand 1, single buffered']
    #allocation6 [shape = 's32[1]{0}', space=sflag, size = 0x4, scoped, tag = 'scoped memory for tpu_custom_call.1']
    #allocation7 [shape = 'u8[8192]{0}', space=vmem, size = 0x2000, scoped, tag = 'output window, operand 0, single buffered']
    %10 = vsyncpa [#allocation3], 0
    %11 = vsyncpa [#allocation6], 0
    %12 = vsyncpa [#allocation4], 0
    // Predicated region
    $region2: #{tpu_custom_call.1} parent=1 // pred_check
      _
    $region3: #{tpu_custom_call.1} parent=1 // pred_check_branch
      %14 = sbr.rel (0) target = $region5
    $region4: #{tpu_custom_call.1} parent=1 // pred_region
      %s16 = ssub.s32 256, 256
      %17 = vsyncadd [#allocation3], %s16
      %s18 = sshll.u32 [#allocation2], 4
      %s19 = int_to_ptr.vmem [resolvable:$true] %s18
      %24 = dma.hbm_to_vmem [thread:$0]  %s0, 256, %s19, [#allocation3], 128, 128, 8
    $region5: #{tpu_custom_call.1} parent=1 // pred_fallthru
      _
    // Predicated region
    $region6: #{tpu_custom_call.1} parent=1 // pred_check
      _
    $region7: #{tpu_custom_call.1} parent=1 // pred_check_branch
      %26 = sbr.rel (0) target = $region9
    $region8: #{tpu_custom_call.1} parent=1 // pred_region
      %s28 = ssub.s32 256, 256
      %29 = vsyncadd [#allocation6], %s28
      %s30 = sshll.u32 [#allocation5], 4
      %s31 = int_to_ptr.vmem [resolvable:$true] %s30
      %36 = dma.hbm_to_vmem [thread:$0]  %s1, 256, %s31, [#allocation6], 128, 128, 8
    $region9: #{tpu_custom_call.1} parent=1 // pred_fallthru
      _
    // Predicated region
    $region10: #{tpu_custom_call.1} parent=1 // pred_check
      _
    $region11: #{tpu_custom_call.1} parent=1 // pred_check_branch
      %38 = sbr.rel (0) target = $region13
    $region12: #{tpu_custom_call.1} parent=1 // pred_region
      _
    $region13: #{tpu_custom_call.1} parent=1 // pred_fallthru
      _
    // Predicated region
    $region14: #{tpu_custom_call.1} parent=1 // pred_check
      _
    $region15: #{tpu_custom_call.1} parent=1 // pred_check_branch
      %40 = sbr.rel (0) target = $region17
    $region16: #{tpu_custom_call.1} parent=1 // pred_region
      _
    $region17: #{tpu_custom_call.1} parent=1 // pred_fallthru
      _
    // Predicated region
    $region18: #{tpu_custom_call.1} parent=1 // pred_check
      _
    $region19: #{tpu_custom_call.1} parent=1 // pred_check_branch
      %42 = sbr.rel (0) target = $region21
    $region20: #{tpu_custom_call.1} parent=1 // pred_region
      _
    $region21: #{tpu_custom_call.1} parent=1 // pred_fallthru
      _
    // Predicated region
    $region22: #{tpu_custom_call.1} parent=1 // pred_check
      _
    $region23: #{tpu_custom_call.1} parent=1 // pred_check_branch
      %44 = sbr.rel (0) target = $region25
    $region24: #{tpu_custom_call.1} parent=1 // pred_region
      %45 = dma.done [#allocation3], 256
    $region25: #{tpu_custom_call.1} parent=1 // pred_fallthru
      _
    // Predicated region
    $region26: #{tpu_custom_call.1} parent=1 // pred_check
      _
    $region27: #{tpu_custom_call.1} parent=1 // pred_check_branch
      %47 = sbr.rel (0) target = $region29
    $region28: #{tpu_custom_call.1} parent=1 // pred_region
      %48 = dma.done [#allocation6], 256
    $region29: #{tpu_custom_call.1} parent=1 // pred_fallthru
      _
    %v49 = vld [vmem:[#allocation2] sm:$0xff]
    %v50 = vld [vmem:[#allocation2 + $0x8] sm:$0xff]
    %v51 = vld [vmem:[#allocation5] sm:$0xff]
    %v52 = vld [vmem:[#allocation5 + $0x8] sm:$0xff]
    %vm53 = vcmask 130048
    %v55 = vsel %vm53, %v49, 0
    %v58 = vsel %vm53, %v50, 0
    %60 = vmatprep.subr.mxu0 0.0
    %61 = vmatpush1.msra.mxu0 %v51
    %62 = vmatprep.subr.mxu0 0.0
    %63 = vmatpush1.msra.mxu0 %v52
    %64 = vmatprep.subr.mxu0 0.0
    %65 = vmatpush1.msra.mxu0 0.0
    %66 = vmatprep.subr.mxu0 0.0
    %67 = vmatpush1.msra.mxu0 0.0
    %68 = vmatprep.subr.mxu0 0.0
    %69 = vmatpush1.msra.mxu0 0.0
    %70 = vmatprep.subr.mxu0 0.0
    %71 = vmatpush1.msra.mxu0 0.0
    %72 = vmatprep.subr.mxu0 0.0
    %73 = vmatpush1.msra.mxu0 0.0
    %74 = vmatprep.subr.mxu0 0.0
    %75 = vmatpush1.msra.mxu0 0.0
    %76 = vmatprep.subr.mxu0 0.0
    %77 = vmatpush1.msra.mxu0 0.0
    %78 = vmatprep.subr.mxu0 0.0
    %79 = vmatpush1.msra.mxu0 0.0
    %80 = vmatprep.subr.mxu0 0.0
    %81 = vmatpush1.msra.mxu0 0.0
    %82 = vmatprep.subr.mxu0 0.0
    %83 = vmatpush1.msra.mxu0 0.0
    %84 = vmatprep.subr.mxu0 0.0
    %85 = vmatpush1.msra.mxu0 0.0
    %86 = vmatprep.subr.mxu0 0.0
    %87 = vmatpush1.msra.mxu0 0.0
    %88 = vmatprep.subr.mxu0 0.0
    %89 = vmatpush1.msra.mxu0 0.0
    %90 = vmatprep.subr.mxu0 0.0
    %91 = vmatpush1.msra.mxu0 0.0
    %92 = vmatprep.subr.mxu0 0.0
    %93 = vmatpush1.msra.mxu0 0.0
    %94 = vmatprep.subr.mxu0 0.0
    %95 = vmatpush1.msra.mxu0 0.0
    %96 = vmatprep.subr.mxu0 0.0
    %97 = vmatpush1.msra.mxu0 0.0
    %98 = vmatprep.subr.mxu0 0.0
    %99 = vmatpush1.msra.mxu0 0.0
    %100 = vmatprep.subr.mxu0 0.0
    %101 = vmatpush1.msra.mxu0 0.0
    %102 = vmatprep.subr.mxu0 0.0
    %103 = vmatpush1.msra.mxu0 0.0
    %104 = vmatprep.subr.mxu0 0.0
    %105 = vmatpush1.msra.mxu0 0.0
    %106 = vmatprep.subr.mxu0 0.0
    %107 = vmatpush1.msra.mxu0 0.0
    %108 = vmatprep.subr.mxu0 0.0
    %109 = vmatpush1.msra.mxu0 0.0
    %110 = vmatprep.subr.mxu0 0.0
    %111 = vmatpush1.msra.mxu0 0.0
    %112 = vmatprep.subr.mxu0 0.0
    %113 = vmatpush1.msra.mxu0 0.0
    %114 = vmatprep.subr.mxu0 0.0
    %115 = vmatpush1.msra.mxu0 0.0
    %116 = vmatprep.subr.mxu0 0.0
    %117 = vmatpush1.msra.mxu0 0.0
    %118 = vmatprep.subr.mxu0 0.0
    %119 = vmatpush1.msra.mxu0 0.0
    %120 = vmatprep.subr.mxu0 0.0
    %121 = vmatpush1.msra.mxu0 0.0
    %122 = vmatprep.subr.mxu0 0.0
    %123 = vmatpush1.msra.mxu0 0.0
    %124 = vmatprep.mubr.f32.mxu0 0.0
    %125 = vmatmul.mubr.f32.gmra.mrb[0].mxu0 %v55
    %v126 = vpop.f32.mrb[0].mxu0
    %v127 = vadd.f32 0.0, %v126
    %v128 = vpop.f32.mrb[0].mxu0
    %129 = vmatprep.mubr.f32.mxu0 0.0
    %130 = vmatmul.mubr.f32.gmra.mrb[0].mxu0 %v58
    %v131 = vpop.f32.mrb[0].mxu0
    %v132 = vadd.f32 0.0, %v131
    %v133 = vpop.f32.mrb[0].mxu0
    %134 = vdwg.mxu0
    %v135 = vld [vmem:[%s2] sm:$0xff]
    %v136 = vld [vmem:[%s2 + $0x8] sm:$0xff]
    %v137 = vld [vmem:[%s2 + $0x10] sm:$0xff]
    %v138 = vld [vmem:[%s2 + $0x18] sm:$0xff]
    %vm139 = vcmask 261120
    %v141 = vsel %vm139, %v127, 0
    %v144 = vsel %vm139, %v132, 0
    %146 = vmatprep.subr.mxu0 0.0
    %147 = vmatpush1.msra.mxu0 %v135
    %148 = vmatprep.subr.mxu0 0.0
    %149 = vmatpush1.msra.mxu0 %v136
    %150 = vmatprep.subr.mxu0 0.0
    %151 = vmatpush1.msra.mxu0 %v137
    %152 = vmatprep.subr.mxu0 0.0
    %153 = vmatpush1.msra.mxu0 %v138
    %154 = vmatprep.subr.mxu0 0.0
    %155 = vmatpush1.msra.mxu0 0.0
    %156 = vmatprep.subr.mxu0 0.0
    %157 = vmatpush1.msra.mxu0 0.0
    %158 = vmatprep.subr.mxu0 0.0
    %159 = vmatpush1.msra.mxu0 0.0
    %160 = vmatprep.subr.mxu0 0.0
    %161 = vmatpush1.msra.mxu0 0.0
    %162 = vmatprep.subr.mxu0 0.0
    %163 = vmatpush1.msra.mxu0 0.0
    %164 = vmatprep.subr.mxu0 0.0
    %165 = vmatpush1.msra.mxu0 0.0
    %166 = vmatprep.subr.mxu0 0.0
    %167 = vmatpush1.msra.mxu0 0.0
    %168 = vmatprep.subr.mxu0 0.0
    %169 = vmatpush1.msra.mxu0 0.0
    %170 = vmatprep.subr.mxu0 0.0
    %171 = vmatpush1.msra.mxu0 0.0
    %172 = vmatprep.subr.mxu0 0.0
    %173 = vmatpush1.msra.mxu0 0.0
    %174 = vmatprep.subr.mxu0 0.0
    %175 = vmatpush1.msra.mxu0 0.0
    %176 = vmatprep.subr.mxu0 0.0
    %177 = vmatpush1.msra.mxu0 0.0
    %178 = vmatprep.subr.mxu0 0.0
    %179 = vmatpush1.msra.mxu0 0.0
    %180 = vmatprep.subr.mxu0 0.0
    %181 = vmatpush1.msra.mxu0 0.0
    %182 = vmatprep.subr.mxu0 0.0
    %183 = vmatpush1.msra.mxu0 0.0
    %184 = vmatprep.subr.mxu0 0.0
    %185 = vmatpush1.msra.mxu0 0.0
    %186 = vmatprep.subr.mxu0 0.0
    %187 = vmatpush1.msra.mxu0 0.0
    %188 = vmatprep.subr.mxu0 0.0
    %189 = vmatpush1.msra.mxu0 0.0
    %190 = vmatprep.subr.mxu0 0.0
    %191 = vmatpush1.msra.mxu0 0.0
    %192 = vmatprep.subr.mxu0 0.0
    %193 = vmatpush1.msra.mxu0 0.0
    %194 = vmatprep.subr.mxu0 0.0
    %195 = vmatpush1.msra.mxu0 0.0
    %196 = vmatprep.subr.mxu0 0.0
    %197 = vmatpush1.msra.mxu0 0.0
    %198 = vmatprep.subr.mxu0 0.0
    %199 = vmatpush1.msra.mxu0 0.0
    %200 = vmatprep.subr.mxu0 0.0
    %201 = vmatpush1.msra.mxu0 0.0
    %202 = vmatprep.subr.mxu0 0.0
    %203 = vmatpush1.msra.mxu0 0.0
    %204 = vmatprep.subr.mxu0 0.0
    %205 = vmatpush1.msra.mxu0 0.0
    %206 = vmatprep.subr.mxu0 0.0
    %207 = vmatpush1.msra.mxu0 0.0
    %208 = vmatprep.subr.mxu0 0.0
    %209 = vmatpush1.msra.mxu0 0.0
    %210 = vmatprep.mubr.f32.mxu0 0.0
    %211 = vmatmul.mubr.f32.gmra.mrb[0].mxu0 %v141
    %v212 = vpop.f32.mrb[0].mxu0
    %v213 = vadd.f32 0.0, %v212
    %v214 = vpop.f32.mrb[0].mxu0
    %215 = vmatprep.mubr.f32.mxu0 0.0
    %216 = vmatmul.mubr.f32.gmra.mrb[0].mxu0 %v144
    %v217 = vpop.f32.mrb[0].mxu0
    %v218 = vadd.f32 0.0, %v217
    %v219 = vpop.f32.mrb[0].mxu0
    %220 = vdwg.mxu0
    %v221 = vld [vmem:[%s3] sm:$0xff]
    %v222 = vld [vmem:[%s3 + $0x8] sm:$0xff]
    %vm223 = vcmask 64512
    %v225 = vsel %vm223, %v221, 0
    %v228 = vsel %vm223, %v222, 0
    %230 = vmatprep.subr.mxu0 0.0
    %231 = vmatpush1.msra.mxu0 %v213
    %232 = vmatprep.subr.mxu0 0.0
    %233 = vmatpush1.msra.mxu0 0.0
    %234 = vmatprep.subr.mxu0 0.0
    %235 = vmatpush1.msra.mxu0 0.0
    %236 = vmatprep.subr.mxu0 0.0
    %237 = vmatpush1.msra.mxu0 0.0
    %238 = vmatprep.subr.mxu0 0.0
    %239 = vmatpush1.msra.mxu0 0.0
    %240 = vmatprep.subr.mxu0 0.0
    %241 = vmatpush1.msra.mxu0 0.0
    %242 = vmatprep.subr.mxu0 0.0
    %243 = vmatpush1.msra.mxu0 0.0
    %244 = vmatprep.subr.mxu0 0.0
    %245 = vmatpush1.msra.mxu0 0.0
    %246 = vmatprep.subr.mxu0 0.0
    %247 = vmatpush1.msra.mxu0 0.0
    %248 = vmatprep.subr.mxu0 0.0
    %249 = vmatpush1.msra.mxu0 0.0
    %250 = vmatprep.subr.mxu0 0.0
    %251 = vmatpush1.msra.mxu0 0.0
    %252 = vmatprep.subr.mxu0 0.0
    %253 = vmatpush1.msra.mxu0 0.0
    %254 = vmatprep.subr.mxu0 0.0
    %255 = vmatpush1.msra.mxu0 0.0
    %256 = vmatprep.subr.mxu0 0.0
    %257 = vmatpush1.msra.mxu0 0.0
    %258 = vmatprep.subr.mxu0 0.0
    %259 = vmatpush1.msra.mxu0 0.0
    %260 = vmatprep.subr.mxu0 0.0
    %261 = vmatpush1.msra.mxu0 0.0
    %262 = vmatprep.subr.mxu0 0.0
    %263 = vmatpush1.msra.mxu0 0.0
    %264 = vmatprep.subr.mxu0 0.0
    %265 = vmatpush1.msra.mxu0 0.0
    %266 = vmatprep.subr.mxu0 0.0
    %267 = vmatpush1.msra.mxu0 0.0
    %268 = vmatprep.subr.mxu0 0.0
    %269 = vmatpush1.msra.mxu0 0.0
    %270 = vmatprep.subr.mxu0 0.0
    %271 = vmatpush1.msra.mxu0 0.0
    %272 = vmatprep.subr.mxu0 0.0
    %273 = vmatpush1.msra.mxu0 0.0
    %274 = vmatprep.subr.mxu0 0.0
    %275 = vmatpush1.msra.mxu0 0.0
    %276 = vmatprep.subr.mxu0 0.0
    %277 = vmatpush1.msra.mxu0 0.0
    %278 = vmatprep.subr.mxu0 0.0
    %279 = vmatpush1.msra.mxu0 0.0
    %280 = vmatprep.subr.mxu0 0.0
    %281 = vmatpush1.msra.mxu0 0.0
    %282 = vmatprep.subr.mxu0 0.0
    %283 = vmatpush1.msra.mxu0 0.0
    %284 = vmatprep.subr.mxu0 0.0
    %285 = vmatpush1.msra.mxu0 0.0
    %286 = vmatprep.subr.mxu0 0.0
    %287 = vmatpush1.msra.mxu0 0.0
    %288 = vmatprep.subr.mxu0 0.0
    %289 = vmatpush1.msra.mxu0 0.0
    %290 = vmatprep.subr.mxu0 0.0
    %291 = vmatpush1.msra.mxu0 0.0
    %292 = vmatprep.subr.mxu0 0.0
    %293 = vmatpush1.msra.mxu0 0.0
    %294 = vmatprep.mubr.f32.mxu0 0.0
    %295 = vmatmul.mubr.f32.gmra.mrb[0].mxu0 %v225
    %v296 = vpop.f32.mrb[0].mxu0
    %v297 = vadd.f32 0.0, %v296
    %v298 = vpop.f32.mrb[0].mxu0
    %299 = vmatprep.mubr.f32.mxu0 0.0
    %300 = vmatmul.mubr.f32.gmra.mrb[0].mxu0 %v228
    %v301 = vpop.f32.mrb[0].mxu0
    %v302 = vadd.f32 0.0, %v301
    %v303 = vpop.f32.mrb[0].mxu0
    %304 = vdwg.mxu0
    %305 = vmatprep.subr.mxu0 0.0
    %306 = vmatpush1.msra.mxu0 %v218
    %307 = vmatprep.subr.mxu0 0.0
    %308 = vmatpush1.msra.mxu0 0.0
    %309 = vmatprep.subr.mxu0 0.0
    %310 = vmatpush1.msra.mxu0 0.0
    %311 = vmatprep.subr.mxu0 0.0
    %312 = vmatpush1.msra.mxu0 0.0
    %313 = vmatprep.subr.mxu0 0.0
    %314 = vmatpush1.msra.mxu0 0.0
    %315 = vmatprep.subr.mxu0 0.0
    %316 = vmatpush1.msra.mxu0 0.0
    %317 = vmatprep.subr.mxu0 0.0
    %318 = vmatpush1.msra.mxu0 0.0
    %319 = vmatprep.subr.mxu0 0.0
    %320 = vmatpush1.msra.mxu0 0.0
    %321 = vmatprep.subr.mxu0 0.0
    %322 = vmatpush1.msra.mxu0 0.0
    %323 = vmatprep.subr.mxu0 0.0
    %324 = vmatpush1.msra.mxu0 0.0
    %325 = vmatprep.subr.mxu0 0.0
    %326 = vmatpush1.msra.mxu0 0.0
    %327 = vmatprep.subr.mxu0 0.0
    %328 = vmatpush1.msra.mxu0 0.0
    %329 = vmatprep.subr.mxu0 0.0
    %330 = vmatpush1.msra.mxu0 0.0
    %331 = vmatprep.subr.mxu0 0.0
    %332 = vmatpush1.msra.mxu0 0.0
    %333 = vmatprep.subr.mxu0 0.0
    %334 = vmatpush1.msra.mxu0 0.0
    %335 = vmatprep.subr.mxu0 0.0
    %336 = vmatpush1.msra.mxu0 0.0
    %337 = vmatprep.subr.mxu0 0.0
    %338 = vmatpush1.msra.mxu0 0.0
    %339 = vmatprep.subr.mxu0 0.0
    %340 = vmatpush1.msra.mxu0 0.0
    %341 = vmatprep.subr.mxu0 0.0
    %342 = vmatpush1.msra.mxu0 0.0
    %343 = vmatprep.subr.mxu0 0.0
    %344 = vmatpush1.msra.mxu0 0.0
    %345 = vmatprep.subr.mxu0 0.0
    %346 = vmatpush1.msra.mxu0 0.0
    %347 = vmatprep.subr.mxu0 0.0
    %348 = vmatpush1.msra.mxu0 0.0
    %349 = vmatprep.subr.mxu0 0.0
    %350 = vmatpush1.msra.mxu0 0.0
    %351 = vmatprep.subr.mxu0 0.0
    %352 = vmatpush1.msra.mxu0 0.0
    %353 = vmatprep.subr.mxu0 0.0
    %354 = vmatpush1.msra.mxu0 0.0
    %355 = vmatprep.subr.mxu0 0.0
    %356 = vmatpush1.msra.mxu0 0.0
    %357 = vmatprep.subr.mxu0 0.0
    %358 = vmatpush1.msra.mxu0 0.0
    %359 = vmatprep.subr.mxu0 0.0
    %360 = vmatpush1.msra.mxu0 0.0
    %361 = vmatprep.subr.mxu0 0.0
    %362 = vmatpush1.msra.mxu0 0.0
    %363 = vmatprep.subr.mxu0 0.0
    %364 = vmatpush1.msra.mxu0 0.0
    %365 = vmatprep.subr.mxu0 0.0
    %366 = vmatpush1.msra.mxu0 0.0
    %367 = vmatprep.subr.mxu0 0.0
    %368 = vmatpush1.msra.mxu0 0.0
    %369 = vmatprep.mubr.f32.mxu0 0.0
    %370 = vmatmul.mubr.f32.gmra.mrb[0].mxu0 %v225
    %v371 = vpop.f32.mrb[0].mxu0
    %v372 = vadd.f32 0.0, %v371
    %v373 = vpop.f32.mrb[0].mxu0
    %374 = vmatprep.mubr.f32.mxu0 0.0
    %375 = vmatmul.mubr.f32.gmra.mrb[0].mxu0 %v228
    %v376 = vpop.f32.mrb[0].mxu0
    %v377 = vadd.f32 0.0, %v376
    %v378 = vpop.f32.mrb[0].mxu0
    %379 = vdwg.mxu0
    %v380 = vld [vmem:[%s4] sm:$0xff]
    %v381 = vld [vmem:[%s4 + $0x8] sm:$0xff]
    %v382 = vld [vmem:[%s4 + $0x10] sm:$0xff]
    %v383 = vld [vmem:[%s4 + $0x18] sm:$0xff]
    %v384 = vld [vmem:[%s4 + $0x20] sm:$0xff]
    %v385 = vld [vmem:[%s4 + $0x28] sm:$0xff]
    %v386 = vld [vmem:[%s4 + $0x30] sm:$0xff]
    %v387 = vld [vmem:[%s4 + $0x38] sm:$0xff]
    %389 = vset.pattern.permute.xlu0 0
    %390 = vperm.xlu0 %389, %v213
    %v391 = vpop.permute.xlu0 %390
    %394 = vset.pattern.permute.xlu0 0
    %395 = vperm.xlu0 %394, %v218
    %v396 = vpop.permute.xlu0 %395
    %v398 = vmul.f32 %v391, %v386
    %v399 = vmul.f32 %v396, %v386
    %v400 = vsel %vm223, %v398, 0.0
    %v401 = vrot.slane %v400, 4
    %v402 = vadd.f32 %v400, %v401
    %v403 = vrot.slane %v402, 2
    %v404 = vadd.f32 %v402, %v403
    %v405 = vrot.slane %v404, 1
    %v406 = vadd.f32 %v404, %v405
    %v407 = vsel %vm223, %v399, 0.0
    %v408 = vrot.slane %v407, 4
    %v409 = vadd.f32 %v407, %v408
    %v410 = vrot.slane %v409, 2
    %v411 = vadd.f32 %v409, %v410
    %v412 = vrot.slane %v411, 1
    %v413 = vadd.f32 %v411, %v412
    %414 = vset.pattern.permute.xlu0 1
    %415 = vperm.xlu0 %414, %v213
    %v416 = vpop.permute.xlu0 %415
    %418 = vset.pattern.permute.xlu0 1
    %419 = vperm.xlu0 %418, %v218
    %v420 = vpop.permute.xlu0 %419
    %v422 = vmul.f32 %v416, %v387
    %v423 = vmul.f32 %v420, %v387
    %v424 = vsel %vm223, %v422, 0.0
    %v425 = vrot.slane %v424, 4
    %v426 = vadd.f32 %v424, %v425
    %v427 = vrot.slane %v426, 2
    %v428 = vadd.f32 %v426, %v427
    %v429 = vrot.slane %v428, 1
    %v430 = vadd.f32 %v428, %v429
    %v431 = vsel %vm223, %v423, 0.0
    %v432 = vrot.slane %v431, 4
    %v433 = vadd.f32 %v431, %v432
    %v434 = vrot.slane %v433, 2
    %v435 = vadd.f32 %v433, %v434
    %v436 = vrot.slane %v435, 1
    %v437 = vadd.f32 %v435, %v436
    %439 = vset.pattern.permute.xlu0 0
    %440 = vperm.xlu0 %439, %v297
    %v441 = vpop.permute.xlu0 %440
    %444 = vset.pattern.permute.xlu0 0
    %445 = vperm.xlu0 %444, %v372
    %v446 = vpop.permute.xlu0 %445
    %v448 = vmul.f32 %v380, %v441
    %v449 = vmul.f32 %v380, %v446
    %451 = vset.pattern.permute.xlu0 0
    %452 = vperm.xlu0 %451, %v302
    %v453 = vpop.permute.xlu0 %452
    %456 = vset.pattern.permute.xlu0 0
    %457 = vperm.xlu0 %456, %v377
    %v458 = vpop.permute.xlu0 %457
    %v460 = vmul.f32 %v381, %v453
    %v461 = vmul.f32 %v381, %v458
    %v462 = vadd.f32 %v448, %v460
    %v463 = vadd.f32 %v449, %v461
    %v464 = vmul.f32 %v382, %v406
    %v465 = vmul.f32 %v382, %v413
    %v466 = vadd.f32 %v462, %v464
    %v467 = vadd.f32 %v463, %v465
    %468 = vset.pattern.permute.xlu0 1
    %469 = vperm.xlu0 %468, %v297
    %v470 = vpop.permute.xlu0 %469
    %472 = vset.pattern.permute.xlu0 1
    %473 = vperm.xlu0 %472, %v372
    %v474 = vpop.permute.xlu0 %473
    %v476 = vmul.f32 %v383, %v470
    %v477 = vmul.f32 %v383, %v474
    %v478 = vadd.f32 %v466, %v476
    %v479 = vadd.f32 %v467, %v477
    %480 = vset.pattern.permute.xlu0 1
    %481 = vperm.xlu0 %480, %v302
    %v482 = vpop.permute.xlu0 %481
    %484 = vset.pattern.permute.xlu0 1
    %485 = vperm.xlu0 %484, %v377
    %v486 = vpop.permute.xlu0 %485
    %v488 = vmul.f32 %v384, %v482
    %v489 = vmul.f32 %v384, %v486
    %v490 = vadd.f32 %v478, %v488
    %v491 = vadd.f32 %v479, %v489
    %v492 = vmul.f32 %v385, %v430
    %v493 = vmul.f32 %v385, %v437
    %v494 = vadd.f32 %v490, %v492
    %v495 = vadd.f32 %v491, %v493
    %vm496 = vcmp.ge.f32.partialorder %v494, 0.0
    %vm497 = vcmp.ge.f32.partialorder %v495, 0.0
    %v498 = vmul.f32 %v494, 0.2
    %v499 = vmul.f32 %v495, 0.2
    %v500 = vsel %vm496, %v494, %v498
    %v501 = vsel %vm497, %v495, %v499
    %v502 = vsel %vm223, %v500, -inf
    %503 = vmax.xlane.f32.xlu0 %v502
    %v504 = vpop.xlane.xlu0 %503
    %v505 = vsel %vm223, %v501, -inf
    %506 = vmax.xlane.f32.xlu0 %v505
    %v507 = vpop.xlane.xlu0 %506
    %v508 = vsub.f32 %v500, %v504
    %v509 = vsub.f32 %v501, %v507
    %v510 = vmul.f32 %v508, 1.442695
    %v511 = vpow.pop %v510
    %v512 = vmul.f32 %v509, 1.442695
    %v513 = vpow.pop %v512
    %v514 = vsel %vm223, %v511, 0.0
    %515 = vadd.xlane.f32.xlu0 %v514
    %v516 = vpop.xlane.xlu0 %515
    %v517 = vsel %vm223, %v513, 0.0
    %518 = vadd.xlane.f32.xlu0 %v517
    %v519 = vpop.xlane.xlu0 %518
    %v520 = vrcp.pop %v516
    %v521 = vrcp.pop %v519
    %v522 = vmul.f32 %v511, %v520
    %v523 = vmul.f32 %v513, %v521
    %v525 = vsel %vm223, %v522, 0
    %527 = vmatprep.subr.mxu0 0.0
    %528 = vmatpush1.msra.mxu0 %v127
    %529 = vmatprep.subr.mxu0 0.0
    %530 = vmatpush1.msra.mxu0 0.0
    %531 = vmatprep.subr.mxu0 0.0
    %532 = vmatpush1.msra.mxu0 0.0
    %533 = vmatprep.subr.mxu0 0.0
    %534 = vmatpush1.msra.mxu0 0.0
    %535 = vmatprep.subr.mxu0 0.0
    %536 = vmatpush1.msra.mxu0 0.0
    %537 = vmatprep.subr.mxu0 0.0
    %538 = vmatpush1.msra.mxu0 0.0
    %539 = vmatprep.subr.mxu0 0.0
    %540 = vmatpush1.msra.mxu0 0.0
    %541 = vmatprep.subr.mxu0 0.0
    %542 = vmatpush1.msra.mxu0 0.0
    %543 = vmatprep.subr.mxu0 0.0
    %544 = vmatpush1.msra.mxu0 0.0
    %545 = vmatprep.subr.mxu0 0.0
    %546 = vmatpush1.msra.mxu0 0.0
    %547 = vmatprep.subr.mxu0 0.0
    %548 = vmatpush1.msra.mxu0 0.0
    %549 = vmatprep.subr.mxu0 0.0
    %550 = vmatpush1.msra.mxu0 0.0
    %551 = vmatprep.subr.mxu0 0.0
    %552 = vmatpush1.msra.mxu0 0.0
    %553 = vmatprep.subr.mxu0 0.0
    %554 = vmatpush1.msra.mxu0 0.0
    %555 = vmatprep.subr.mxu0 0.0
    %556 = vmatpush1.msra.mxu0 0.0
    %557 = vmatprep.subr.mxu0 0.0
    %558 = vmatpush1.msra.mxu0 0.0
    %559 = vmatprep.subr.mxu0 0.0
    %560 = vmatpush1.msra.mxu0 0.0
    %561 = vmatprep.subr.mxu0 0.0
    %562 = vmatpush1.msra.mxu0 0.0
    %563 = vmatprep.subr.mxu0 0.0
    %564 = vmatpush1.msra.mxu0 0.0
    %565 = vmatprep.subr.mxu0 0.0
    %566 = vmatpush1.msra.mxu0 0.0
    %567 = vmatprep.subr.mxu0 0.0
    %568 = vmatpush1.msra.mxu0 0.0
    %569 = vmatprep.subr.mxu0 0.0
    %570 = vmatpush1.msra.mxu0 0.0
    %571 = vmatprep.subr.mxu0 0.0
    %572 = vmatpush1.msra.mxu0 0.0
    %573 = vmatprep.subr.mxu0 0.0
    %574 = vmatpush1.msra.mxu0 0.0
    %575 = vmatprep.subr.mxu0 0.0
    %576 = vmatpush1.msra.mxu0 0.0
    %577 = vmatprep.subr.mxu0 0.0
    %578 = vmatpush1.msra.mxu0 0.0
    %579 = vmatprep.subr.mxu0 0.0
    %580 = vmatpush1.msra.mxu0 0.0
    %581 = vmatprep.subr.mxu0 0.0
    %582 = vmatpush1.msra.mxu0 0.0
    %583 = vmatprep.subr.mxu0 0.0
    %584 = vmatpush1.msra.mxu0 0.0
    %585 = vmatprep.subr.mxu0 0.0
    %586 = vmatpush1.msra.mxu0 0.0
    %587 = vmatprep.subr.mxu0 0.0
    %588 = vmatpush1.msra.mxu0 0.0
    %589 = vmatprep.subr.mxu0 0.0
    %590 = vmatpush1.msra.mxu0 0.0
    %591 = vmatprep.mubr.f32.mxu0 0.0
    %592 = vmatmul.mubr.f32.gmra.mrb[0].mxu0 %v525
    %v593 = vpop.f32.mrb[0].mxu0
    %v594 = vadd.f32 0.0, %v593
    %v595 = vpop.f32.mrb[0].mxu0
    %596 = vdwg.mxu0
    %v598 = vsel %vm223, %v523, 0
    %600 = vmatprep.subr.mxu0 0.0
    %601 = vmatpush1.msra.mxu0 %v132
    %602 = vmatprep.subr.mxu0 0.0
    %603 = vmatpush1.msra.mxu0 0.0
    %604 = vmatprep.subr.mxu0 0.0
    %605 = vmatpush1.msra.mxu0 0.0
    %606 = vmatprep.subr.mxu0 0.0
    %607 = vmatpush1.msra.mxu0 0.0
    %608 = vmatprep.subr.mxu0 0.0
    %609 = vmatpush1.msra.mxu0 0.0
    %610 = vmatprep.subr.mxu0 0.0
    %611 = vmatpush1.msra.mxu0 0.0
    %612 = vmatprep.subr.mxu0 0.0
    %613 = vmatpush1.msra.mxu0 0.0
    %614 = vmatprep.subr.mxu0 0.0
    %615 = vmatpush1.msra.mxu0 0.0
    %616 = vmatprep.subr.mxu0 0.0
    %617 = vmatpush1.msra.mxu0 0.0
    %618 = vmatprep.subr.mxu0 0.0
    %619 = vmatpush1.msra.mxu0 0.0
    %620 = vmatprep.subr.mxu0 0.0
    %621 = vmatpush1.msra.mxu0 0.0
    %622 = vmatprep.subr.mxu0 0.0
    %623 = vmatpush1.msra.mxu0 0.0
    %624 = vmatprep.subr.mxu0 0.0
    %625 = vmatpush1.msra.mxu0 0.0
    %626 = vmatprep.subr.mxu0 0.0
    %627 = vmatpush1.msra.mxu0 0.0
    %628 = vmatprep.subr.mxu0 0.0
    %629 = vmatpush1.msra.mxu0 0.0
    %630 = vmatprep.subr.mxu0 0.0
    %631 = vmatpush1.msra.mxu0 0.0
    %632 = vmatprep.subr.mxu0 0.0
    %633 = vmatpush1.msra.mxu0 0.0
    %634 = vmatprep.subr.mxu0 0.0
    %635 = vmatpush1.msra.mxu0 0.0
    %636 = vmatprep.subr.mxu0 0.0
    %637 = vmatpush1.msra.mxu0 0.0
    %638 = vmatprep.subr.mxu0 0.0
    %639 = vmatpush1.msra.mxu0 0.0
    %640 = vmatprep.subr.mxu0 0.0
    %641 = vmatpush1.msra.mxu0 0.0
    %642 = vmatprep.subr.mxu0 0.0
    %643 = vmatpush1.msra.mxu0 0.0
    %644 = vmatprep.subr.mxu0 0.0
    %645 = vmatpush1.msra.mxu0 0.0
    %646 = vmatprep.subr.mxu0 0.0
    %647 = vmatpush1.msra.mxu0 0.0
    %648 = vmatprep.subr.mxu0 0.0
    %649 = vmatpush1.msra.mxu0 0.0
    %650 = vmatprep.subr.mxu0 0.0
    %651 = vmatpush1.msra.mxu0 0.0
    %652 = vmatprep.subr.mxu0 0.0
    %653 = vmatpush1.msra.mxu0 0.0
    %654 = vmatprep.subr.mxu0 0.0
    %655 = vmatpush1.msra.mxu0 0.0
    %656 = vmatprep.subr.mxu0 0.0
    %657 = vmatpush1.msra.mxu0 0.0
    %658 = vmatprep.subr.mxu0 0.0
    %659 = vmatpush1.msra.mxu0 0.0
    %660 = vmatprep.subr.mxu0 0.0
    %661 = vmatpush1.msra.mxu0 0.0
    %662 = vmatprep.subr.mxu0 0.0
    %663 = vmatpush1.msra.mxu0 0.0
    %664 = vmatprep.mubr.f32.mxu0 0.0
    %665 = vmatmul.mubr.f32.gmra.mrb[0].mxu0 %v598
    %v666 = vpop.f32.mrb[0].mxu0
    %v667 = vadd.f32 0.0, %v666
    %v668 = vpop.f32.mrb[0].mxu0
    %669 = vdwg.mxu0
    %vm670 = vcmp.gt.f32.partialorder %v594, 0.0
    %vm671 = vcmp.gt.f32.partialorder %v667, 0.0
    %v672 = vmin.f32 %v594, 0.0
    %v673 = vmin.f32 %v667, 0.0
    %v674 = vmul.f32 %v672, 1.442695
    %v675 = vpow.pop %v674
    %v676 = vmul.f32 %v673, 1.442695
    %v677 = vpow.pop %v676
    %v678 = vsub.f32 %v675, 1.0
    %v679 = vsub.f32 %v677, 1.0
    %v680 = vsel %vm670, %v594, %v678
    %v681 = vsel %vm671, %v667, %v679
    %682 = vst.msk [vmem:[#allocation7] sm:$0xff] %vm139, %v680
    %683 = vst.msk [vmem:[#allocation7 + $0x8] sm:$0xff] %vm139, %v681
    // Predicated region
    $region30: #{tpu_custom_call.1} parent=1 // pred_check
      _
    $region31: #{tpu_custom_call.1} parent=1 // pred_check_branch
      %685 = sbr.rel (0) target = $region33
    $region32: #{tpu_custom_call.1} parent=1 // pred_region
      %s687 = ssub.s32 256, 256
      %688 = vsyncadd [#allocation4], %s687
      %s689 = sshll.u32 [#allocation7], 4
      %s690 = int_to_ptr.vmem [resolvable:$true] %s689
      %695 = dma.vmem_to_hbm [thread:$0]  %s690, 256, %s5, [#allocation4], 128, 128, 8
    $region33: #{tpu_custom_call.1} parent=1 // pred_fallthru
      _
    // Predicated region
    $region34: #{tpu_custom_call.1} parent=1 // pred_check
      _
    $region35: #{tpu_custom_call.1} parent=1 // pred_check_branch
      %697 = sbr.rel (0) target = $region37
    $region36: #{tpu_custom_call.1} parent=1 // pred_region
      %698 = dma.done [#allocation4], 256
    $region37: #{tpu_custom_call.1} parent=1 // pred_fallthru
      _
    %699 = vsyncpa [#allocation3], 1
    %700 = vsyncpa [#allocation6], 1
    %701 = vsyncpa [#allocation4], 1

</llo_original>
